<compile_context>
chip_gen: v7x
topology: tpu7x:2x2x1
jax: 0.10.0
libtpu: 0.0.40
codegen_flags: <defaults>
</compile_context>

<pallas_src>
import functools

import jax
import jax.numpy as jnp
from jax.experimental import pallas as pl
from jax.experimental.pallas import tpu as pltpu

_LANE = 128
_SUBLANE = 8


def _round_up(n, m):
    return (n + m - 1) // m * m


def _pad2d(a, rows, cols):
    return jnp.pad(a, ((0, rows - a.shape[0]), (0, cols - a.shape[1])))


def _mlp_kernel(x_ref, w1_ref, b1_ref, w2_ref, b2_ref, w3_ref, b3_ref,
                out_ref, logits_ref):
    """Fused 3-layer MLP on one (TB, 128k) batch tile.

    out = relu(relu(x@W1+b1)@W2+b2)@W3+b3 ; logits = post-ReLU hidden2.
    Matmul operands are bf16; accumulation + bias + ReLU are f32.
    """
    x = x_ref[...]                                               # bf16 (TB, IN_P)

    h1 = jnp.dot(x, w1_ref[...], preferred_element_type=jnp.float32)
    h1 = jnp.maximum(h1 + b1_ref[...], 0.0)                      # f32

    h2 = jnp.dot(h1.astype(jnp.bfloat16), w2_ref[...],
                 preferred_element_type=jnp.float32)
    h2 = jnp.maximum(h2 + b2_ref[...], 0.0)                      # f32

    logits_ref[...] = h2.astype(logits_ref.dtype)                # lane-dense f32

    h3 = jnp.dot(h2.astype(jnp.bfloat16), w3_ref[...],
                 preferred_element_type=jnp.float32)
    out_ref[...] = (h3 + b3_ref[...]).astype(out_ref.dtype)      # lane-dense


@functools.partial(jax.jit, static_argnames=("block_batch",))
def ann_forward(x, w1, b1, w2, b2, w3, b3, *, block_batch=256):
    """JAX/Pallas equivalent of ann.forward. Returns (out, logits)."""
    batch, in_dim = x.shape
    h1_dim, h2_dim, out_dim = w1.shape[1], w2.shape[1], w3.shape[1]

    # Lane-dense (128-padded) feature dims.
    in_p = _round_up(in_dim, _LANE)
    h1_p = _round_up(h1_dim, _LANE)
    h2_p = _round_up(h2_dim, _LANE)
    od_p = _round_up(out_dim, _LANE)

    # Batch tile: multiple of 8 sublanes; small enough for v7x VMEM budget.
    tb = min(int(block_batch), _round_up(batch, _SUBLANE))
    tb = _round_up(tb, _SUBLANE)
    batch_p = _round_up(batch, tb)
    grid = (batch_p // tb,)

    # bf16 matmul operands (halves DMA bytes, native MXU dtype); f32 biases.
    x_p = _pad2d(x, batch_p, in_p).astype(jnp.bfloat16)
    w1_p = _pad2d(w1, in_p, h1_p).astype(jnp.bfloat16)
    w2_p = _pad2d(w2, h1_p, h2_p).astype(jnp.bfloat16)
    w3_p = _pad2d(w3, h2_p, od_p).astype(jnp.bfloat16)
    b1_p = _pad2d(b1.astype(jnp.float32).reshape(1, -1), 1, h1_p)
    b2_p = _pad2d(b2.astype(jnp.float32).reshape(1, -1), 1, h2_p)
    b3_p = _pad2d(b3.astype(jnp.float32).reshape(1, -1), 1, od_p)

    vmem = pltpu.MemorySpace.VMEM
    tile = lambda shape: pl.BlockSpec(shape, lambda i: (i, 0), memory_space=vmem)
    resident = lambda shape: pl.BlockSpec(shape, lambda i: (0, 0), memory_space=vmem)

    flops = 2 * batch_p * (in_p * h1_p + h1_p * h2_p + h2_p * od_p)
    bytes_accessed = (
        x_p.size * 2
        + (w1_p.size + w2_p.size + w3_p.size) * 2
        + (b1_p.size + b2_p.size + b3_p.size) * 4
        + batch_p * (od_p + h2_p) * 4)

    out_pad, logits_pad = pl.pallas_call(
        _mlp_kernel,
        out_shape=(
            jax.ShapeDtypeStruct((batch_p, od_p), x.dtype),
            jax.ShapeDtypeStruct((batch_p, h2_p), jnp.float32),
        ),
        grid=grid,
        in_specs=[
            tile((tb, in_p)),
            resident((in_p, h1_p)), resident((1, h1_p)),
            resident((h1_p, h2_p)), resident((1, h2_p)),
            resident((h2_p, od_p)), resident((1, od_p)),
        ],
        out_specs=(
            tile((tb, od_p)),
            tile((tb, h2_p)),
        ),
        compiler_params=pltpu.CompilerParams(
            dimension_semantics=("parallel",)),
        cost_estimate=pl.CostEstimate(
            flops=flops, transcendentals=0, bytes_accessed=bytes_accessed),
    )(x_p, w1_p, b1_p, w2_p, b2_p, w3_p, b3_p)

    out = out_pad[:batch, :out_dim]
    logits = logits_pad[:batch, :h2_dim]
    return out, logits


def init_linear_params(key, in_dim, out_dim):
    """PyTorch nn.Linear-style init: U(-1/sqrt(in), 1/sqrt(in)).

    Returns W with shape (in_dim, out_dim) (transposed vs torch) and b (out_dim,).
    """
    kw, kb = jax.random.split(key)
    bound = 1.0 / jnp.sqrt(jnp.float32(in_dim))
    w = jax.random.uniform(kw, (in_dim, out_dim), jnp.float32, -bound, bound)
    b = jax.random.uniform(kb, (out_dim,), jnp.float32, -bound, bound)
    return w, b


def reference_forward(x, w1, b1, w2, b2, w3, b3):
    h1 = jnp.maximum(x @ w1 + b1, 0.0)
    h2 = jnp.maximum(h1 @ w2 + b2, 0.0)
    return h2 @ w3 + b3, h2


if __name__ == "__main__":
    cfg = {
        "input_dim": 32,
        "hidden_dim1": 64,
        "hidden_dim2": 64,
        "output_dim": 16,
    }

    key = jax.random.PRNGKey(0)
    kx, k1, k2, k3, kx2 = jax.random.split(key, 5)

    w1, b1 = init_linear_params(k1, cfg["input_dim"], cfg["hidden_dim1"])
    w2, b2 = init_linear_params(k2, cfg["hidden_dim1"], cfg["hidden_dim2"])
    w3, b3 = init_linear_params(k3, cfg["hidden_dim2"], cfg["output_dim"])

    # batch=8: single grid step; batch=300: multi-step grid + batch padding.
    for batch, kk in ((8, kx), (300, kx2)):
        x = jax.random.normal(kk, (batch, cfg["input_dim"]), jnp.float32)

        out, logits = ann_forward(x, w1, b1, w2, b2, w3, b3)
        jax.block_until_ready((out, logits))

        ref_out, ref_logits = reference_forward(x, w1, b1, w2, b2, w3, b3)
        assert out.shape == ref_out.shape and logits.shape == ref_logits.shape
        # bf16 matmul operands (f32 accumulation) -> ~1e-2 absolute error.
        assert jnp.allclose(out, ref_out, atol=5e-2, rtol=5e-2)
        assert jnp.allclose(logits, ref_logits, atol=5e-2, rtol=5e-2)

    print("KERNEL_OK")
</pallas_src>

<mosaic_0001>
module attributes {stable_mosaic.version = 11 : i64} {
  func.func @_mlp_kernel(%arg0: i32, %arg1: memref<8x128xbf16, #tpu.memory_space<vmem>>, %arg2: memref<128x128xbf16, #tpu.memory_space<vmem>>, %arg3: memref<1x128xf32, #tpu.memory_space<vmem>>, %arg4: memref<128x128xbf16, #tpu.memory_space<vmem>>, %arg5: memref<1x128xf32, #tpu.memory_space<vmem>>, %arg6: memref<128x128xbf16, #tpu.memory_space<vmem>>, %arg7: memref<1x128xf32, #tpu.memory_space<vmem>>, %arg8: memref<8x128xf32, #tpu.memory_space<vmem>>, %arg9: memref<8x128xf32, #tpu.memory_space<vmem>>) attributes {dimension_semantics = [#tpu.dimension_semantics<parallel>], iteration_bounds = array<i64: 1>, scalar_prefetch = 0 : i64, scratch_operands = 0 : i64, tpu.core_type = #tpu.core_type<tc>, window_params = [{transform_indices = @transform_0, window_bounds = array<i64: 8, 128>}, {pipeline_mode = #tpu.pipeline_mode<synchronous>, transform_indices = @transform_1, window_bounds = array<i64: 128, 128>}, {pipeline_mode = #tpu.pipeline_mode<synchronous>, transform_indices = @transform_2, window_bounds = array<i64: 1, 128>}, {pipeline_mode = #tpu.pipeline_mode<synchronous>, transform_indices = @transform_3, window_bounds = array<i64: 128, 128>}, {pipeline_mode = #tpu.pipeline_mode<synchronous>, transform_indices = @transform_4, window_bounds = array<i64: 1, 128>}, {pipeline_mode = #tpu.pipeline_mode<synchronous>, transform_indices = @transform_5, window_bounds = array<i64: 128, 128>}, {pipeline_mode = #tpu.pipeline_mode<synchronous>, transform_indices = @transform_6, window_bounds = array<i64: 1, 128>}, {transform_indices = @transform_7, window_bounds = array<i64: 8, 128>}, {transform_indices = @transform_8, window_bounds = array<i64: 8, 128>}]} {
    %c0 = arith.constant 0 : index
    %c0_0 = arith.constant 0 : index
    %0 = vector.load %arg1[%c0, %c0_0] : memref<8x128xbf16, #tpu.memory_space<vmem>>, vector<8x128xbf16>
    %c0_1 = arith.constant 0 : index
    %c0_2 = arith.constant 0 : index
    %1 = vector.load %arg2[%c0_1, %c0_2] : memref<128x128xbf16, #tpu.memory_space<vmem>>, vector<128x128xbf16>
    %cst = arith.constant dense<0.000000e+00> : vector<8x128xf32>
    %2 = tpu.matmul %0, %1, %cst {dimension_numbers = #tpu.dot_dimension_numbers<[1], [0], [0], [1], [0, 0, 1, 1], [], []>} : vector<8x128xbf16>, vector<128x128xbf16>, vector<8x128xf32> -> vector<8x128xf32>
    %c0_3 = arith.constant 0 : index
    %c0_4 = arith.constant 0 : index
    %3 = vector.load %arg3[%c0_3, %c0_4] : memref<1x128xf32, #tpu.memory_space<vmem>>, vector<1x128xf32>
    %4 = vector.broadcast %3 : vector<1x128xf32> to vector<8x128xf32>
    %5 = arith.addf %2, %4 : vector<8x128xf32>
    %cst_5 = arith.constant 0.000000e+00 : f32
    %6 = vector.broadcast %cst_5 : f32 to vector<8x128xf32>
    %7 = arith.maximumf %5, %6 : vector<8x128xf32>
    %8 = arith.truncf %7 : vector<8x128xf32> to vector<8x128xbf16>
    %c0_6 = arith.constant 0 : index
    %c0_7 = arith.constant 0 : index
    %9 = vector.load %arg4[%c0_6, %c0_7] : memref<128x128xbf16, #tpu.memory_space<vmem>>, vector<128x128xbf16>
    %cst_8 = arith.constant dense<0.000000e+00> : vector<8x128xf32>
    %10 = tpu.matmul %8, %9, %cst_8 {dimension_numbers = #tpu.dot_dimension_numbers<[1], [0], [0], [1], [0, 0, 1, 1], [], []>} : vector<8x128xbf16>, vector<128x128xbf16>, vector<8x128xf32> -> vector<8x128xf32>
    %c0_9 = arith.constant 0 : index
    %c0_10 = arith.constant 0 : index
    %11 = vector.load %arg5[%c0_9, %c0_10] : memref<1x128xf32, #tpu.memory_space<vmem>>, vector<1x128xf32>
    %12 = vector.broadcast %11 : vector<1x128xf32> to vector<8x128xf32>
    %13 = arith.addf %10, %12 : vector<8x128xf32>
    %cst_11 = arith.constant 0.000000e+00 : f32
    %14 = vector.broadcast %cst_11 : f32 to vector<8x128xf32>
    %15 = arith.maximumf %13, %14 : vector<8x128xf32>
    %c0_12 = arith.constant 0 : index
    %c0_13 = arith.constant 0 : index
    %16 = vector.load %arg9[%c0_12, %c0_13] : memref<8x128xf32, #tpu.memory_space<vmem>>, vector<8x128xf32>
    tpu.vector_store %arg9[%c0_12, %c0_13], %15 {strides = array<i32>} : memref<8x128xf32, #tpu.memory_space<vmem>>, vector<8x128xf32>,
    %17 = arith.truncf %15 : vector<8x128xf32> to vector<8x128xbf16>
    %c0_14 = arith.constant 0 : index
    %c0_15 = arith.constant 0 : index
    %18 = vector.load %arg6[%c0_14, %c0_15] : memref<128x128xbf16, #tpu.memory_space<vmem>>, vector<128x128xbf16>
    %cst_16 = arith.constant dense<0.000000e+00> : vector<8x128xf32>
    %19 = tpu.matmul %17, %18, %cst_16 {dimension_numbers = #tpu.dot_dimension_numbers<[1], [0], [0], [1], [0, 0, 1, 1], [], []>} : vector<8x128xbf16>, vector<128x128xbf16>, vector<8x128xf32> -> vector<8x128xf32>
    %c0_17 = arith.constant 0 : index
    %c0_18 = arith.constant 0 : index
    %20 = vector.load %arg7[%c0_17, %c0_18] : memref<1x128xf32, #tpu.memory_space<vmem>>, vector<1x128xf32>
    %21 = vector.broadcast %20 : vector<1x128xf32> to vector<8x128xf32>
    %22 = arith.addf %19, %21 : vector<8x128xf32>
    %c0_19 = arith.constant 0 : index
    %c0_20 = arith.constant 0 : index
    %23 = vector.load %arg8[%c0_19, %c0_20] : memref<8x128xf32, #tpu.memory_space<vmem>>, vector<8x128xf32>
    tpu.vector_store %arg8[%c0_19, %c0_20], %22 {strides = array<i32>} : memref<8x128xf32, #tpu.memory_space<vmem>>, vector<8x128xf32>,
    return
  }
  func.func @transform_0(%arg0: i32) -> (i32, i32) {
    %c0_i32 = arith.constant 0 : i32
    %c0_i32_0 = arith.constant 0 : i32
    return %arg0, %c0_i32 : i32, i32
  }
  func.func @transform_1(%arg0: i32) -> (i32, i32) {
    %c0_i32 = arith.constant 0 : i32
    %c0_i32_0 = arith.constant 0 : i32
    %c0_i32_1 = arith.constant 0 : i32
    return %c0_i32, %c0_i32_0 : i32, i32
  }
  func.func @transform_2(%arg0: i32) -> (i32, i32) {
    %c0_i32 = arith.constant 0 : i32
    %c0_i32_0 = arith.constant 0 : i32
    %c0_i32_1 = arith.constant 0 : i32
    return %c0_i32, %c0_i32_0 : i32, i32
  }
  func.func @transform_3(%arg0: i32) -> (i32, i32) {
    %c0_i32 = arith.constant 0 : i32
    %c0_i32_0 = arith.constant 0 : i32
    %c0_i32_1 = arith.constant 0 : i32
    return %c0_i32, %c0_i32_0 : i32, i32
  }
  func.func @transform_4(%arg0: i32) -> (i32, i32) {
    %c0_i32 = arith.constant 0 : i32
    %c0_i32_0 = arith.constant 0 : i32
    %c0_i32_1 = arith.constant 0 : i32
    return %c0_i32, %c0_i32_0 : i32, i32
  }
  func.func @transform_5(%arg0: i32) -> (i32, i32) {
    %c0_i32 = arith.constant 0 : i32
    %c0_i32_0 = arith.constant 0 : i32
    %c0_i32_1 = arith.constant 0 : i32
    return %c0_i32, %c0_i32_0 : i32, i32
  }
  func.func @transform_6(%arg0: i32) -> (i32, i32) {
    %c0_i32 = arith.constant 0 : i32
    %c0_i32_0 = arith.constant 0 : i32
    %c0_i32_1 = arith.constant 0 : i32
    return %c0_i32, %c0_i32_0 : i32, i32
  }
  func.func @transform_7(%arg0: i32) -> (i32, i32) {
    %c0_i32 = arith.constant 0 : i32
    %c0_i32_0 = arith.constant 0 : i32
    return %arg0, %c0_i32 : i32, i32
  }
  func.func @transform_8(%arg0: i32) -> (i32, i32) {
    %c0_i32 = arith.constant 0 : i32
    %c0_i32_0 = arith.constant 0 : i32
    return %arg0, %c0_i32 : i32, i32
  }
}

</mosaic_0001>

<llo_original>
// kernel: ann_forward.1
$region0: #{ann_forward.1}
  #allocation0 [shape = 'u32[]', space=smem, size = 0x4, offset = 0x4, fixed_abs, tag = 'smem constant byte address 0x4 - core index']
  #allocation1 [shape = 'u32[144,128]{1,0:T(1,128)}', space=vmem, size = 0x12000, scoped, tag = 'internal scratch']
  %s0 = inlined_call_operand.vmem [shape: bf16[8,128], index: 0, kind: input, shape index: {}]
  %s1 = inlined_call_operand.vmem [shape: bf16[128,128], index: 1, kind: input, shape index: {}]
  %s2 = inlined_call_operand.vmem [shape: f32[1,128], index: 2, kind: input, shape index: {}]
  %s3 = inlined_call_operand.vmem [shape: bf16[128,128], index: 3, kind: input, shape index: {}]
  %s4 = inlined_call_operand.vmem [shape: f32[1,128], index: 4, kind: input, shape index: {}]
  %s5 = inlined_call_operand.vmem [shape: bf16[128,128], index: 5, kind: input, shape index: {}]
  %s6 = inlined_call_operand.vmem [shape: f32[1,128], index: 6, kind: input, shape index: {}]
  %s7 = inlined_call_operand.hbm [shape: f32[8,128], index: 7, kind: output, shape index: {0}]
  %s8 = inlined_call_operand.hbm [shape: f32[8,128], index: 8, kind: output, shape index: {1}]
  %9 = xla_tuple %s7, %s8
  %s10 = sld [smem:[#allocation0]]
  $region46: #{ann_forward.1} parent=0
    _
  %s12 = ssub.s32 1, %s10
  %s13 = scalar_select 0, %s12, %s10
  $region1: #{ann_forward.1} parent=0
    #allocation2 [shape = 'u8[4096]{0}', space=vmem, size = 0x1000, scoped, tag = 'output window, operand 0, single buffered']
    #allocation3 [shape = 's32[1]{0}', space=sflag, size = 0x4, scoped, tag = 'scoped memory for ann_forward.1']
    #allocation4 [shape = 'u8[4096]{0}', space=vmem, size = 0x1000, scoped, tag = 'output window, operand 1, single buffered']
    #allocation5 [shape = 's32[1]{0}', space=sflag, size = 0x4, scoped, tag = 'scoped memory for ann_forward.1']
    %14 = vsyncpa [#allocation3], 0
    %15 = vsyncpa [#allocation5], 0
    // Predicated region
    $region2: #{ann_forward.1} parent=1 // pred_check
      _
    $region3: #{ann_forward.1} parent=1 // pred_check_branch
      %17 = sbr.rel (0) target = $region5
    $region4: #{ann_forward.1} parent=1 // pred_region
      _
    $region5: #{ann_forward.1} parent=1 // pred_fallthru
      _
    // Predicated region
    $region6: #{ann_forward.1} parent=1 // pred_check
      _
    $region7: #{ann_forward.1} parent=1 // pred_check_branch
      %19 = sbr.rel (0) target = $region9
    $region8: #{ann_forward.1} parent=1 // pred_region
      _
    $region9: #{ann_forward.1} parent=1 // pred_fallthru
      _
    // Predicated region
    $region10: #{ann_forward.1} parent=1 // pred_check
      _
    $region11: #{ann_forward.1} parent=1 // pred_check_branch
      %21 = sbr.rel (0) target = $region13
    $region12: #{ann_forward.1} parent=1 // pred_region
      _
    $region13: #{ann_forward.1} parent=1 // pred_fallthru
      _
    // Predicated region
    $region14: #{ann_forward.1} parent=1 // pred_check
      _
    $region15: #{ann_forward.1} parent=1 // pred_check_branch
      %23 = sbr.rel (0) target = $region17
    $region16: #{ann_forward.1} parent=1 // pred_region
      _
    $region17: #{ann_forward.1} parent=1 // pred_fallthru
      _
    // Predicated region
    $region18: #{ann_forward.1} parent=1 // pred_check
      _
    $region19: #{ann_forward.1} parent=1 // pred_check_branch
      %25 = sbr.rel (0) target = $region21
    $region20: #{ann_forward.1} parent=1 // pred_region
      _
    $region21: #{ann_forward.1} parent=1 // pred_fallthru
      _
    // Predicated region
    $region22: #{ann_forward.1} parent=1 // pred_check
      _
    $region23: #{ann_forward.1} parent=1 // pred_check_branch
      %27 = sbr.rel (0) target = $region25
    $region24: #{ann_forward.1} parent=1 // pred_region
      _
    $region25: #{ann_forward.1} parent=1 // pred_fallthru
      _
    // Predicated region
    $region26: #{ann_forward.1} parent=1 // pred_check
      _
    $region27: #{ann_forward.1} parent=1 // pred_check_branch
      %29 = sbr.rel (0) target = $region29
    $region28: #{ann_forward.1} parent=1 // pred_region
      _
    $region29: #{ann_forward.1} parent=1 // pred_fallthru
      _
    %v31 = vld [vmem:[%s0] sm:$0xf]
    %v32 = vld [vmem:[%s1] sm:$0xf]
    %v33 = vld [vmem:[%s1 + $0x4] sm:$0xf]
    %v34 = vld [vmem:[%s1 + $0x8] sm:$0xf]
    %v35 = vld [vmem:[%s1 + $0xc] sm:$0xf]
    %v36 = vld [vmem:[%s1 + $0x10] sm:$0xf]
    %v37 = vld [vmem:[%s1 + $0x14] sm:$0xf]
    %v38 = vld [vmem:[%s1 + $0x18] sm:$0xf]
    %v39 = vld [vmem:[%s1 + $0x1c] sm:$0xf]
    %v40 = vld [vmem:[%s1 + $0x20] sm:$0xf]
    %v41 = vld [vmem:[%s1 + $0x24] sm:$0xf]
    %v42 = vld [vmem:[%s1 + $0x28] sm:$0xf]
    %v43 = vld [vmem:[%s1 + $0x2c] sm:$0xf]
    %v44 = vld [vmem:[%s1 + $0x30] sm:$0xf]
    %v45 = vld [vmem:[%s1 + $0x34] sm:$0xf]
    %v46 = vld [vmem:[%s1 + $0x38] sm:$0xf]
    %v47 = vld [vmem:[%s1 + $0x3c] sm:$0xf]
    %v48 = vld [vmem:[%s2] sm:$0x1]
    %v50 = vlaneseq
    %v51 = vshrl.u32 %v50, 7
    %v52 = vsub.s32 0, %v51
    %v53 = vrot.slane %v48, %v52
    %v71 = vunpack.c.l.b16 %v32
    %v72 = vunpack.c.l.b16 %v33
    %v73 = vunpack.c.l.b16 %v34
    %v74 = vunpack.c.l.b16 %v35
    %v75 = vunpack.c.l.b16 %v36
    %v76 = vunpack.c.l.b16 %v37
    %v77 = vunpack.c.l.b16 %v38
    %v78 = vunpack.c.l.b16 %v39
    %v79 = vunpack.c.l.b16 %v40
    %v80 = vunpack.c.l.b16 %v41
    %v81 = vunpack.c.l.b16 %v42
    %v82 = vunpack.c.l.b16 %v43
    %v83 = vunpack.c.l.b16 %v44
    %v84 = vunpack.c.l.b16 %v45
    %v85 = vunpack.c.l.b16 %v46
    %v86 = vunpack.c.l.b16 %v47
    %v87 = vpack.c.b16 %v72, %v71
    %v88 = vpack.c.b16 %v74, %v73
    %v89 = vpack.c.b16 %v76, %v75
    %v90 = vpack.c.b16 %v78, %v77
    %v91 = vpack.c.b16 %v80, %v79
    %v92 = vpack.c.b16 %v82, %v81
    %v93 = vpack.c.b16 %v84, %v83
    %v94 = vpack.c.b16 %v86, %v85
    %103 = vmatprep.subr.bf16.mxu0 0
    %104 = vmatpush1.bf16.msra.mxu0 %v87
    %105 = vmatprep.subr.bf16.mxu0 0
    %106 = vmatpush1.bf16.msra.mxu0 %v88
    %107 = vmatprep.subr.bf16.mxu0 0
    %108 = vmatpush1.bf16.msra.mxu0 %v89
    %109 = vmatprep.subr.bf16.mxu0 0
    %110 = vmatpush1.bf16.msra.mxu0 %v90
    %111 = vmatprep.subr.bf16.mxu0 0
    %112 = vmatpush1.bf16.msra.mxu0 %v91
    %113 = vmatprep.subr.bf16.mxu0 0
    %114 = vmatpush1.bf16.msra.mxu0 %v92
    %115 = vmatprep.subr.bf16.mxu0 0
    %116 = vmatpush1.bf16.msra.mxu0 %v93
    %117 = vmatprep.subr.bf16.mxu0 0
    %118 = vmatpush1.bf16.msra.mxu0 %v94
    %119 = vmatprep.subr.bf16.mxu0 0
    %120 = vmatpush1.bf16.msra.mxu0 0
    %121 = vmatprep.subr.bf16.mxu0 0
    %122 = vmatpush1.bf16.msra.mxu0 0
    %123 = vmatprep.subr.bf16.mxu0 0
    %124 = vmatpush1.bf16.msra.mxu0 0
    %125 = vmatprep.subr.bf16.mxu0 0
    %126 = vmatpush1.bf16.msra.mxu0 0
    %127 = vmatprep.subr.bf16.mxu0 0
    %128 = vmatpush1.bf16.msra.mxu0 0
    %129 = vmatprep.subr.bf16.mxu0 0
    %130 = vmatpush1.bf16.msra.mxu0 0
    %131 = vmatprep.subr.bf16.mxu0 0
    %132 = vmatpush1.bf16.msra.mxu0 0
    %133 = vmatprep.subr.bf16.mxu0 0
    %134 = vmatpush1.bf16.msra.mxu0 0
    %135 = vmatprep.mubr.bf16.mxu0 0
    %136 = vmatmul.mubr.bf16.gmra.mrb[0].mxu0 %v31
    %v137 = vpop.f32.mrb[0].mxu0
    %v138 = vadd.f32 %v53, %v137
    %v139 = vpop.f32.mrb[0].mxu0
    %v140 = vpop.f32.mrb[0].mxu0
    %v141 = vpop.f32.mrb[0].mxu0
    %142 = vdwg.mxu0
    %v143 = vmax.f32 %v138, 0.0
    %v144 = vpack.c.bf16 %v143, %v143
    %v145 = vld [vmem:[%s3] sm:$0xf]
    %v146 = vld [vmem:[%s3 + $0x4] sm:$0xf]
    %v147 = vld [vmem:[%s3 + $0x8] sm:$0xf]
    %v148 = vld [vmem:[%s3 + $0xc] sm:$0xf]
    %v149 = vld [vmem:[%s3 + $0x10] sm:$0xf]
    %v150 = vld [vmem:[%s3 + $0x14] sm:$0xf]
    %v151 = vld [vmem:[%s3 + $0x18] sm:$0xf]
    %v152 = vld [vmem:[%s3 + $0x1c] sm:$0xf]
    %v153 = vld [vmem:[%s3 + $0x20] sm:$0xf]
    %v154 = vld [vmem:[%s3 + $0x24] sm:$0xf]
    %v155 = vld [vmem:[%s3 + $0x28] sm:$0xf]
    %v156 = vld [vmem:[%s3 + $0x2c] sm:$0xf]
    %v157 = vld [vmem:[%s3 + $0x30] sm:$0xf]
    %v158 = vld [vmem:[%s3 + $0x34] sm:$0xf]
    %v159 = vld [vmem:[%s3 + $0x38] sm:$0xf]
    %v160 = vld [vmem:[%s3 + $0x3c] sm:$0xf]
    %v161 = vld [vmem:[%s4] sm:$0x1]
    %v163 = vlaneseq
    %v164 = vshrl.u32 %v163, 7
    %v165 = vsub.s32 0, %v164
    %v166 = vrot.slane %v161, %v165
    %v184 = vunpack.c.l.b16 %v145
    %v185 = vunpack.c.l.b16 %v146
    %v186 = vunpack.c.l.b16 %v147
    %v187 = vunpack.c.l.b16 %v148
    %v188 = vunpack.c.l.b16 %v149
    %v189 = vunpack.c.l.b16 %v150
    %v190 = vunpack.c.l.b16 %v151
    %v191 = vunpack.c.l.b16 %v152
    %v192 = vunpack.c.l.b16 %v153
    %v193 = vunpack.c.l.b16 %v154
    %v194 = vunpack.c.l.b16 %v155
    %v195 = vunpack.c.l.b16 %v156
    %v196 = vunpack.c.l.b16 %v157
    %v197 = vunpack.c.l.b16 %v158
    %v198 = vunpack.c.l.b16 %v159
    %v199 = vunpack.c.l.b16 %v160
    %v200 = vpack.c.b16 %v185, %v184
    %v201 = vpack.c.b16 %v187, %v186
    %v202 = vpack.c.b16 %v189, %v188
    %v203 = vpack.c.b16 %v191, %v190
    %v204 = vpack.c.b16 %v193, %v192
    %v205 = vpack.c.b16 %v195, %v194
    %v206 = vpack.c.b16 %v197, %v196
    %v207 = vpack.c.b16 %v199, %v198
    %216 = vmatprep.subr.bf16.mxu0 0
    %217 = vmatpush1.bf16.msra.mxu0 %v200
    %218 = vmatprep.subr.bf16.mxu0 0
    %219 = vmatpush1.bf16.msra.mxu0 %v201
    %220 = vmatprep.subr.bf16.mxu0 0
    %221 = vmatpush1.bf16.msra.mxu0 %v202
    %222 = vmatprep.subr.bf16.mxu0 0
    %223 = vmatpush1.bf16.msra.mxu0 %v203
    %224 = vmatprep.subr.bf16.mxu0 0
    %225 = vmatpush1.bf16.msra.mxu0 %v204
    %226 = vmatprep.subr.bf16.mxu0 0
    %227 = vmatpush1.bf16.msra.mxu0 %v205
    %228 = vmatprep.subr.bf16.mxu0 0
    %229 = vmatpush1.bf16.msra.mxu0 %v206
    %230 = vmatprep.subr.bf16.mxu0 0
    %231 = vmatpush1.bf16.msra.mxu0 %v207
    %232 = vmatprep.subr.bf16.mxu0 0
    %233 = vmatpush1.bf16.msra.mxu0 0
    %234 = vmatprep.subr.bf16.mxu0 0
    %235 = vmatpush1.bf16.msra.mxu0 0
    %236 = vmatprep.subr.bf16.mxu0 0
    %237 = vmatpush1.bf16.msra.mxu0 0
    %238 = vmatprep.subr.bf16.mxu0 0
    %239 = vmatpush1.bf16.msra.mxu0 0
    %240 = vmatprep.subr.bf16.mxu0 0
    %241 = vmatpush1.bf16.msra.mxu0 0
    %242 = vmatprep.subr.bf16.mxu0 0
    %243 = vmatpush1.bf16.msra.mxu0 0
    %244 = vmatprep.subr.bf16.mxu0 0
    %245 = vmatpush1.bf16.msra.mxu0 0
    %246 = vmatprep.subr.bf16.mxu0 0
    %247 = vmatpush1.bf16.msra.mxu0 0
    %248 = vmatprep.mubr.bf16.mxu0 0
    %249 = vmatmul.mubr.bf16.gmra.mrb[0].mxu0 %v144
    %v250 = vpop.f32.mrb[0].mxu0
    %v251 = vadd.f32 %v166, %v250
    %v252 = vpop.f32.mrb[0].mxu0
    %v253 = vpop.f32.mrb[0].mxu0
    %v254 = vpop.f32.mrb[0].mxu0
    %255 = vdwg.mxu0
    %v256 = vmax.f32 %v251, 0.0
    %257 = vst [vmem:[#allocation4] sm:$0xff] %v256
    %v258 = vpack.c.bf16 %v256, %v256
    %v259 = vld [vmem:[%s5] sm:$0xf]
    %v260 = vld [vmem:[%s5 + $0x4] sm:$0xf]
    %v261 = vld [vmem:[%s5 + $0x8] sm:$0xf]
    %v262 = vld [vmem:[%s5 + $0xc] sm:$0xf]
    %v263 = vld [vmem:[%s5 + $0x10] sm:$0xf]
    %v264 = vld [vmem:[%s5 + $0x14] sm:$0xf]
    %v265 = vld [vmem:[%s5 + $0x18] sm:$0xf]
    %v266 = vld [vmem:[%s5 + $0x1c] sm:$0xf]
    %v267 = vld [vmem:[%s5 + $0x20] sm:$0xf]
    %v268 = vld [vmem:[%s5 + $0x24] sm:$0xf]
    %v269 = vld [vmem:[%s5 + $0x28] sm:$0xf]
    %v270 = vld [vmem:[%s5 + $0x2c] sm:$0xf]
    %v271 = vld [vmem:[%s5 + $0x30] sm:$0xf]
    %v272 = vld [vmem:[%s5 + $0x34] sm:$0xf]
    %v273 = vld [vmem:[%s5 + $0x38] sm:$0xf]
    %v274 = vld [vmem:[%s5 + $0x3c] sm:$0xf]
    %v275 = vld [vmem:[%s6] sm:$0x1]
    %v277 = vlaneseq
    %v278 = vshrl.u32 %v277, 7
    %v279 = vsub.s32 0, %v278
    %v280 = vrot.slane %v275, %v279
    %v298 = vunpack.c.l.b16 %v259
    %v299 = vunpack.c.l.b16 %v260
    %v300 = vunpack.c.l.b16 %v261
    %v301 = vunpack.c.l.b16 %v262
    %v302 = vunpack.c.l.b16 %v263
    %v303 = vunpack.c.l.b16 %v264
    %v304 = vunpack.c.l.b16 %v265
    %v305 = vunpack.c.l.b16 %v266
    %v306 = vunpack.c.l.b16 %v267
    %v307 = vunpack.c.l.b16 %v268
    %v308 = vunpack.c.l.b16 %v269
    %v309 = vunpack.c.l.b16 %v270
    %v310 = vunpack.c.l.b16 %v271
    %v311 = vunpack.c.l.b16 %v272
    %v312 = vunpack.c.l.b16 %v273
    %v313 = vunpack.c.l.b16 %v274
    %v314 = vpack.c.b16 %v299, %v298
    %v315 = vpack.c.b16 %v301, %v300
    %v316 = vpack.c.b16 %v303, %v302
    %v317 = vpack.c.b16 %v305, %v304
    %v318 = vpack.c.b16 %v307, %v306
    %v319 = vpack.c.b16 %v309, %v308
    %v320 = vpack.c.b16 %v311, %v310
    %v321 = vpack.c.b16 %v313, %v312
    %330 = vmatprep.subr.bf16.mxu0 0
    %331 = vmatpush1.bf16.msra.mxu0 %v314
    %332 = vmatprep.subr.bf16.mxu0 0
    %333 = vmatpush1.bf16.msra.mxu0 %v315
    %334 = vmatprep.subr.bf16.mxu0 0
    %335 = vmatpush1.bf16.msra.mxu0 %v316
    %336 = vmatprep.subr.bf16.mxu0 0
    %337 = vmatpush1.bf16.msra.mxu0 %v317
    %338 = vmatprep.subr.bf16.mxu0 0
    %339 = vmatpush1.bf16.msra.mxu0 %v318
    %340 = vmatprep.subr.bf16.mxu0 0
    %341 = vmatpush1.bf16.msra.mxu0 %v319
    %342 = vmatprep.subr.bf16.mxu0 0
    %343 = vmatpush1.bf16.msra.mxu0 %v320
    %344 = vmatprep.subr.bf16.mxu0 0
    %345 = vmatpush1.bf16.msra.mxu0 %v321
    %346 = vmatprep.subr.bf16.mxu0 0
    %347 = vmatpush1.bf16.msra.mxu0 0
    %348 = vmatprep.subr.bf16.mxu0 0
    %349 = vmatpush1.bf16.msra.mxu0 0
    %350 = vmatprep.subr.bf16.mxu0 0
    %351 = vmatpush1.bf16.msra.mxu0 0
    %352 = vmatprep.subr.bf16.mxu0 0
    %353 = vmatpush1.bf16.msra.mxu0 0
    %354 = vmatprep.subr.bf16.mxu0 0
    %355 = vmatpush1.bf16.msra.mxu0 0
    %356 = vmatprep.subr.bf16.mxu0 0
    %357 = vmatpush1.bf16.msra.mxu0 0
    %358 = vmatprep.subr.bf16.mxu0 0
    %359 = vmatpush1.bf16.msra.mxu0 0
    %360 = vmatprep.subr.bf16.mxu0 0
    %361 = vmatpush1.bf16.msra.mxu0 0
    %362 = vmatprep.mubr.bf16.mxu0 0
    %363 = vmatmul.mubr.bf16.gmra.mrb[0].mxu0 %v258
    %v364 = vpop.f32.mrb[0].mxu0
    %v365 = vadd.f32 %v280, %v364
    %v366 = vpop.f32.mrb[0].mxu0
    %v367 = vpop.f32.mrb[0].mxu0
    %v368 = vpop.f32.mrb[0].mxu0
    %369 = vdwg.mxu0
    %370 = vst [vmem:[#allocation2] sm:$0xff] %v365
    // Predicated region
    $region30: #{ann_forward.1} parent=1 // pred_check
      _
    $region31: #{ann_forward.1} parent=1 // pred_check_branch
      %372 = sbr.rel (0) target = $region33
    $region32: #{ann_forward.1} parent=1 // pred_region
      %s374 = ssub.s32 128, 128
      %375 = vsyncadd [#allocation3], %s374
      %s377 = sshll.u32 [#allocation2], 4
      %s378 = int_to_ptr.vmem [resolvable:$true] %s377
      %380 = dma.vmem_to_hbm [thread:$0]  %s378, 128, %s7, [#allocation3]
    $region33: #{ann_forward.1} parent=1 // pred_fallthru
      _
    // Predicated region
    $region34: #{ann_forward.1} parent=1 // pred_check
      _
    $region35: #{ann_forward.1} parent=1 // pred_check_branch
      %382 = sbr.rel (0) target = $region37
    $region36: #{ann_forward.1} parent=1 // pred_region
      %s384 = ssub.s32 128, 128
      %385 = vsyncadd [#allocation5], %s384
      %s387 = sshll.u32 [#allocation4], 4
      %s388 = int_to_ptr.vmem [resolvable:$true] %s387
      %390 = dma.vmem_to_hbm [thread:$0]  %s388, 128, %s8, [#allocation5]
    $region37: #{ann_forward.1} parent=1 // pred_fallthru
      _
    // Predicated region
    $region38: #{ann_forward.1} parent=1 // pred_check
      _
    $region39: #{ann_forward.1} parent=1 // pred_check_branch
      %392 = sbr.rel (0) target = $region41
    $region40: #{ann_forward.1} parent=1 // pred_region
      %393 = dma.done [#allocation3], 128
    $region41: #{ann_forward.1} parent=1 // pred_fallthru
      _
    // Predicated region
    $region42: #{ann_forward.1} parent=1 // pred_check
      _
    $region43: #{ann_forward.1} parent=1 // pred_check_branch
      %395 = sbr.rel (0) target = $region45
    $region44: #{ann_forward.1} parent=1 // pred_region
      %396 = dma.done [#allocation5], 128
    $region45: #{ann_forward.1} parent=1 // pred_fallthru
      _
    %397 = vsyncpa [#allocation3], 1
    %398 = vsyncpa [#allocation5], 1

</llo_original>
